<compile_context>
chip_gen: v6e
topology: v6e:2x2x1
jax: 0.10.0
libtpu: 0.0.40
codegen_flags: <defaults>
</compile_context>

<pallas_src>
import jax
import jax.numpy as jnp
from jax.experimental import pallas as pl
from jax.experimental.pallas import tpu as pltpu


# ----------------------------- kernel body -----------------------------------

def block1d_kernel(x_ref, w1_ref, b1_ref, w2_ref, b2_ref, o_ref):
    x = x_ref[...]                                                   # (tb, C)
    h = jnp.dot(x, w1_ref[...],
                preferred_element_type=jnp.float32) + b1_ref[...]    # (tb, Fp)
    h = jnp.maximum(h, 0.0)                                          # ReLU
    y = jnp.dot(h, w2_ref[...],
                preferred_element_type=jnp.float32) + b2_ref[...]    # (tb, C)
    o_ref[...] = jnp.tanh(y).astype(o_ref.dtype)                     # Tanh


# ----------------------------- helpers ----------------------------------------

def _round_up(x, m):
    return ((x + m - 1) // m) * m


_TB_MAX = 1024  # (1024, 32) f32 tile = 128 KiB; x2 double-buffered in/out + weights
                # stays far under the 32 MiB scoped VMEM default on all of
                # v5e / v6e / v7x (64 MiB physical on v7x).


def _choose_tb(B):
    """Row-tile size: multiple of 8, capped, and >=2 grid blocks when B > 8."""
    if B <= 8:
        return 8
    half = -(-B // 2)                     # ceil(B / 2)
    return min(_TB_MAX, _round_up(half, 8))


def prepare_block1d_params(w1, b1, w2, b2, f_pad_to=128):
    """One-time param prep (call at init, NOT per forward).

    w1: (F, C) torch layout, b1: (F,), w2: (C, F) torch layout, b2: (C,).
    Returns (W1^T padded, b1 padded, W2^T padded, b2) with F zero-padded to a
    lane-friendly width.
    """
    n_filters, in_channels = w1.shape
    f_pad = max(f_pad_to, _round_up(n_filters, 8))

    w1t = jnp.zeros((in_channels, f_pad), dtype=w1.dtype).at[:, :n_filters].set(w1.T)
    b1p = jnp.zeros((1, f_pad), dtype=b1.dtype).at[:, :n_filters].set(b1)
    w2t = jnp.zeros((f_pad, in_channels), dtype=w2.dtype).at[:n_filters, :].set(w2.T)
    b2p = b2.reshape(1, in_channels)
    return w1t, b1p, w2t, b2p


# ----------------------------- forward ----------------------------------------

def block1d_forward(x, params):
    """x: (..., in_channels). params: output of prepare_block1d_params()."""
    w1t, b1p, w2t, b2p = params
    in_channels = x.shape[-1]
    f_pad = w1t.shape[1]
    lead_shape = x.shape[:-1]

    x2d = x.reshape(-1, in_channels)
    B = x2d.shape[0]

    tb = _choose_tb(B)
    B_pad = _round_up(B, tb)
    if B_pad != B:
        x2d = jnp.pad(x2d, ((0, B_pad - B), (0, 0)))   # zero tail rows, sliced off below
    grid = (B_pad // tb,)

    itemsize = jnp.dtype(x.dtype).itemsize
    cost = pl.CostEstimate(
        flops=4 * B_pad * in_channels * f_pad,
        transcendentals=B_pad * in_channels,
        bytes_accessed=(2 * B_pad * in_channels * itemsize        # x in + out
                        + (w1t.size + b1p.size + w2t.size + b2p.size) * itemsize),
    )

    out2d = pl.pallas_call(
        block1d_kernel,
        out_shape=jax.ShapeDtypeStruct((B_pad, in_channels), x.dtype),
        grid_spec=pltpu.PrefetchScalarGridSpec(
            num_scalar_prefetch=0,
            grid=grid,
            in_specs=[
                pl.BlockSpec((tb, in_channels), lambda i: (i, 0)),         # x tile
                pl.BlockSpec((in_channels, f_pad), lambda i: (0, 0)),      # W1^T (padded)
                pl.BlockSpec((1, f_pad), lambda i: (0, 0)),                # b1   (padded)
                pl.BlockSpec((f_pad, in_channels), lambda i: (0, 0)),      # W2^T (padded)
                pl.BlockSpec((1, in_channels), lambda i: (0, 0)),          # b2
            ],
            out_specs=pl.BlockSpec((tb, in_channels), lambda i: (i, 0)),
        ),
        compiler_params=pltpu.CompilerParams(
            dimension_semantics=("parallel",)),
        cost_estimate=cost,
    )(x2d, w1t, b1p, w2t, b2p)

    if B_pad != B:
        out2d = out2d[:B]
    return out2d.reshape(*lead_shape, in_channels)


# ----------------------------- test -------------------------------------------

if __name__ == "__main__":
    key = jax.random.PRNGKey(0)
    in_channels = 32
    n_filters = 10

    k_x, k_w1, k_b1, k_w2, k_b2 = jax.random.split(key, 5)

    # Small input consistent with Linear over last dim: (batch=2, seq=8, C=32)
    x = jax.random.normal(k_x, (2, 8, in_channels), dtype=jnp.float32)

    # Deterministic parameter init, torch nn.Linear layout: weight (out, in), bias (out,)
    bound1 = 1.0 / (in_channels ** 0.5)
    w1 = jax.random.uniform(k_w1, (n_filters, in_channels),
                            minval=-bound1, maxval=bound1, dtype=jnp.float32)
    b1 = jax.random.uniform(k_b1, (n_filters,),
                            minval=-bound1, maxval=bound1, dtype=jnp.float32)
    bound2 = 1.0 / (n_filters ** 0.5)
    w2 = jax.random.uniform(k_w2, (in_channels, n_filters),
                            minval=-bound2, maxval=bound2, dtype=jnp.float32)
    b2 = jax.random.uniform(k_b2, (in_channels,),
                            minval=-bound2, maxval=bound2, dtype=jnp.float32)

    # One-time parameter prep (transpose + F padding hoisted out of forward).
    params = prepare_block1d_params(w1, b1, w2, b2)

    out = block1d_forward(x, params)
    jax.block_until_ready(out)

    # Reference check in plain JAX
    ref = jnp.tanh(jnp.maximum(x @ w1.T + b1, 0.0) @ w2.T + b2)
    assert out.shape == x.shape
    assert jnp.allclose(out, ref, atol=1e-5, rtol=1e-5)

    print("KERNEL_OK")
</pallas_src>

<mosaic_0001>
module attributes {stable_mosaic.version = 11 : i64} {
  func.func @block1d_kernel(%arg0: i32, %arg1: memref<8x32xf32, #tpu.memory_space<vmem>>, %arg2: memref<32x128xf32, #tpu.memory_space<vmem>>, %arg3: memref<1x128xf32, #tpu.memory_space<vmem>>, %arg4: memref<128x32xf32, #tpu.memory_space<vmem>>, %arg5: memref<1x32xf32, #tpu.memory_space<vmem>>, %arg6: memref<8x32xf32, #tpu.memory_space<vmem>>) attributes {dimension_semantics = [#tpu.dimension_semantics<parallel>], iteration_bounds = array<i64: 2>, scalar_prefetch = 0 : i64, scratch_operands = 0 : i64, tpu.core_type = #tpu.core_type<tc>, window_params = [{transform_indices = @transform_0, window_bounds = array<i64: 8, 32>}, {pipeline_mode = #tpu.pipeline_mode<synchronous>, transform_indices = @transform_1, window_bounds = array<i64: 32, 128>}, {pipeline_mode = #tpu.pipeline_mode<synchronous>, transform_indices = @transform_2, window_bounds = array<i64: 1, 128>}, {pipeline_mode = #tpu.pipeline_mode<synchronous>, transform_indices = @transform_3, window_bounds = array<i64: 128, 32>}, {pipeline_mode = #tpu.pipeline_mode<synchronous>, transform_indices = @transform_4, window_bounds = array<i64: 1, 32>}, {transform_indices = @transform_5, window_bounds = array<i64: 8, 32>}]} {
    %c0 = arith.constant 0 : index
    %c0_0 = arith.constant 0 : index
    %0 = vector.load %arg1[%c0, %c0_0] : memref<8x32xf32, #tpu.memory_space<vmem>>, vector<8x32xf32>
    %c0_1 = arith.constant 0 : index
    %c0_2 = arith.constant 0 : index
    %1 = vector.load %arg2[%c0_1, %c0_2] : memref<32x128xf32, #tpu.memory_space<vmem>>, vector<32x128xf32>
    %cst = arith.constant dense<0.000000e+00> : vector<8x128xf32>
    %2 = tpu.matmul %0, %1, %cst {dimension_numbers = #tpu.dot_dimension_numbers<[1], [0], [0], [1], [0, 0, 1, 1], [], []>} : vector<8x32xf32>, vector<32x128xf32>, vector<8x128xf32> -> vector<8x128xf32>
    %c0_3 = arith.constant 0 : index
    %c0_4 = arith.constant 0 : index
    %3 = vector.load %arg3[%c0_3, %c0_4] : memref<1x128xf32, #tpu.memory_space<vmem>>, vector<1x128xf32>
    %4 = vector.broadcast %3 : vector<1x128xf32> to vector<8x128xf32>
    %5 = arith.addf %2, %4 : vector<8x128xf32>
    %cst_5 = arith.constant 0.000000e+00 : f32
    %6 = vector.broadcast %cst_5 : f32 to vector<8x128xf32>
    %7 = arith.maximumf %5, %6 : vector<8x128xf32>
    %c0_6 = arith.constant 0 : index
    %c0_7 = arith.constant 0 : index
    %8 = vector.load %arg4[%c0_6, %c0_7] : memref<128x32xf32, #tpu.memory_space<vmem>>, vector<128x32xf32>
    %cst_8 = arith.constant dense<0.000000e+00> : vector<8x32xf32>
    %9 = tpu.matmul %7, %8, %cst_8 {dimension_numbers = #tpu.dot_dimension_numbers<[1], [0], [0], [1], [0, 0, 1, 1], [], []>} : vector<8x128xf32>, vector<128x32xf32>, vector<8x32xf32> -> vector<8x32xf32>
    %c0_9 = arith.constant 0 : index
    %c0_10 = arith.constant 0 : index
    %10 = vector.load %arg5[%c0_9, %c0_10] : memref<1x32xf32, #tpu.memory_space<vmem>>, vector<1x32xf32>
    %11 = vector.broadcast %10 : vector<1x32xf32> to vector<8x32xf32>
    %12 = arith.addf %9, %11 : vector<8x32xf32>
    %13 = math.tanh %12 : vector<8x32xf32>
    %c0_11 = arith.constant 0 : index
    %c0_12 = arith.constant 0 : index
    %14 = vector.load %arg6[%c0_11, %c0_12] : memref<8x32xf32, #tpu.memory_space<vmem>>, vector<8x32xf32>
    tpu.vector_store %arg6[%c0_11, %c0_12], %13 {strides = array<i32>} : memref<8x32xf32, #tpu.memory_space<vmem>>, vector<8x32xf32>,
    return
  }
  func.func @transform_0(%arg0: i32) -> (i32, i32) {
    %c0_i32 = arith.constant 0 : i32
    %c0_i32_0 = arith.constant 0 : i32
    return %arg0, %c0_i32 : i32, i32
  }
  func.func @transform_1(%arg0: i32) -> (i32, i32) {
    %c0_i32 = arith.constant 0 : i32
    %c0_i32_0 = arith.constant 0 : i32
    %c0_i32_1 = arith.constant 0 : i32
    return %c0_i32, %c0_i32_0 : i32, i32
  }
  func.func @transform_2(%arg0: i32) -> (i32, i32) {
    %c0_i32 = arith.constant 0 : i32
    %c0_i32_0 = arith.constant 0 : i32
    %c0_i32_1 = arith.constant 0 : i32
    return %c0_i32, %c0_i32_0 : i32, i32
  }
  func.func @transform_3(%arg0: i32) -> (i32, i32) {
    %c0_i32 = arith.constant 0 : i32
    %c0_i32_0 = arith.constant 0 : i32
    %c0_i32_1 = arith.constant 0 : i32
    return %c0_i32, %c0_i32_0 : i32, i32
  }
  func.func @transform_4(%arg0: i32) -> (i32, i32) {
    %c0_i32 = arith.constant 0 : i32
    %c0_i32_0 = arith.constant 0 : i32
    %c0_i32_1 = arith.constant 0 : i32
    return %c0_i32, %c0_i32_0 : i32, i32
  }
  func.func @transform_5(%arg0: i32) -> (i32, i32) {
    %c0_i32 = arith.constant 0 : i32
    %c0_i32_0 = arith.constant 0 : i32
    return %arg0, %c0_i32 : i32, i32
  }
}

</mosaic_0001>

<llo_original>
// kernel: tpu_custom_call.1
$region0: #{tpu_custom_call.1}
  #allocation0 [shape = 'u32[]', space=smem, size = 0x4, offset = 0x4, fixed_abs, tag = 'smem constant byte address 0x4 - core index']
  #allocation1 [shape = 'u32[144,128]{1,0:T(1,128)}', space=vmem, size = 0x12000, scoped, tag = 'internal scratch']
  %s0 = inlined_call_operand.vmem [shape: f32[16,32], index: 0, kind: input, shape index: {}]
  %s1 = inlined_call_operand.vmem [shape: f32[32,128], index: 1, kind: input, shape index: {}]
  %s2 = inlined_call_operand.vmem [shape: f32[1,128], index: 2, kind: input, shape index: {}]
  %s3 = inlined_call_operand.vmem [shape: f32[128,32], index: 3, kind: input, shape index: {}]
  %s4 = inlined_call_operand.vmem [shape: f32[1,32], index: 4, kind: input, shape index: {}]
  %s5 = inlined_call_operand.hbm [shape: f32[16,32], index: 5, kind: output, shape index: {}]
  %s6 = sld [smem:[#allocation0]]
  $region53: #{tpu_custom_call.1} parent=0
    _
  %s8 = ssub.s32 1, %s6
  %s9 = scalar_select 0, %s8, %s6
  $region1: #{tpu_custom_call.1} parent=0
    #allocation2 [shape = 'u8[8192]{0}', space=vmem, size = 0x2000, scoped, tag = 'output window, operand 0']
    #allocation3 [shape = 's32[2]{0}', space=sflag, size = 0x8, scoped, tag = 'scoped memory for tpu_custom_call.1']
    %10 = vsyncpa [#allocation3], 0
    %s11 = scalar_lea.sflag [#allocation3], 1
    %12 = vsyncpa %s11, 0
    loop: start=0, step=1, limit=4
    $region2: #{tpu_custom_call.1} parent=1 // loop_pre_header
      _
    $region3: #{tpu_custom_call.1} parent=1 // loop_header
      %s14 = sphi 0, %s18
      %p15 = scmp.ge.s32.totalorder %s14, 4
      %s24 = sphi 0, %s26
      %s27 = sphi 0, %s24
      %s28 = sphi 0, %s27
      %s44 = sphi 0, %s28
      %s48 = sphi 0, %s48
      %s50 = sphi 0, %s48
      %s51 = sphi 0, %s50
      %s65 = sphi 0, %s51
      %s69 = sphi 0, %s69
      %s71 = sphi 0, %s69
      %s72 = sphi 0, %s71
      %s86 = sphi 0, %s72
      %s90 = sphi 0, %s90
      %s92 = sphi 0, %s90
      %s93 = sphi 0, %s92
      %s107 = sphi 0, %s93
      %s111 = sphi 0, %s111
      %s113 = sphi 0, %s111
      %s114 = sphi 0, %s113
      %s128 = sphi 0, %s114
      %s134 = sphi 0, %s136
      %s137 = sphi 0, %s134
      %s138 = sphi 0, %s137
      %s154 = sphi 0, %s138
    $region4: #{tpu_custom_call.1} parent=1 // loop_header_branch
      %17 = sbr.rel (%p15) target = $region8
    $region5: #{tpu_custom_call.1} parent=1 // loop_body
      %s19 = ssub.s32 %s14, 1
      %s20 = ssub.s32 %s14, 2
      %s21 = sadd.s32 %s14, 1
      %s22 = ssub.s32 %s14, %s21
      %p23 = scmp.eq.s32.totalorder %s22, 0
      %s25 = sadd.s32 %s24, 1
      %s26 = scalar_select %p23, %s24, %s25
      %p29 = pneg %p23
      %p30 = scmp.eq.s32.totalorder %s14, 1
      %p31 = por %p29, %p30
      %p32 = scmp.ne.s32.totalorder %s24, %s27
      %p33 = scmp.eq.s32.totalorder %s14, 0
      %p34 = por %p32, %p33
      %p35 = scmp.ne.s32.totalorder %s24, %s27
      %p36 = scmp.eq.s32.totalorder %s19, 1
      %p37 = por %p35, %p36
      %p38 = scmp.ne.s32.totalorder %s27, %s28
      %p39 = scmp.eq.s32.totalorder %s19, 0
      %p40 = por %p38, %p39
      %p41 = scmp.ne.s32.totalorder %s27, %s28
      %p42 = scmp.eq.s32.totalorder %s20, 1
      %p43 = por %p41, %p42
      %p45 = scmp.ne.s32.totalorder %s28, %s44
      %p46 = scmp.eq.s32.totalorder %s20, 0
      %p47 = por %p45, %p46
      %s49 = sadd.s32 %s48, 1
      %p52 = scmp.eq.s32.totalorder %s14, 1
      %p53 = scmp.ne.s32.totalorder %s48, %s50
      %p54 = scmp.eq.s32.totalorder %s14, 0
      %p55 = por %p53, %p54
      %p56 = scmp.ne.s32.totalorder %s48, %s50
      %p57 = scmp.eq.s32.totalorder %s19, 1
      %p58 = por %p56, %p57
      %p59 = scmp.ne.s32.totalorder %s50, %s51
      %p60 = scmp.eq.s32.totalorder %s19, 0
      %p61 = por %p59, %p60
      %p62 = scmp.ne.s32.totalorder %s50, %s51
      %p63 = scmp.eq.s32.totalorder %s20, 1
      %p64 = por %p62, %p63
      %p66 = scmp.ne.s32.totalorder %s51, %s65
      %p67 = scmp.eq.s32.totalorder %s20, 0
      %p68 = por %p66, %p67
      %s70 = sadd.s32 %s69, 1
      %p73 = scmp.eq.s32.totalorder %s14, 1
      %p74 = scmp.ne.s32.totalorder %s69, %s71
      %p75 = scmp.eq.s32.totalorder %s14, 0
      %p76 = por %p74, %p75
      %p77 = scmp.ne.s32.totalorder %s69, %s71
      %p78 = scmp.eq.s32.totalorder %s19, 1
      %p79 = por %p77, %p78
      %p80 = scmp.ne.s32.totalorder %s71, %s72
      %p81 = scmp.eq.s32.totalorder %s19, 0
      %p82 = por %p80, %p81
      %p83 = scmp.ne.s32.totalorder %s71, %s72
      %p84 = scmp.eq.s32.totalorder %s20, 1
      %p85 = por %p83, %p84
      %p87 = scmp.ne.s32.totalorder %s72, %s86
      %p88 = scmp.eq.s32.totalorder %s20, 0
      %p89 = por %p87, %p88
      %s91 = sadd.s32 %s90, 1
      %p94 = scmp.eq.s32.totalorder %s14, 1
      %p95 = scmp.ne.s32.totalorder %s90, %s92
      %p96 = scmp.eq.s32.totalorder %s14, 0
      %p97 = por %p95, %p96
      %p98 = scmp.ne.s32.totalorder %s90, %s92
      %p99 = scmp.eq.s32.totalorder %s19, 1
      %p100 = por %p98, %p99
      %p101 = scmp.ne.s32.totalorder %s92, %s93
      %p102 = scmp.eq.s32.totalorder %s19, 0
      %p103 = por %p101, %p102
      %p104 = scmp.ne.s32.totalorder %s92, %s93
      %p105 = scmp.eq.s32.totalorder %s20, 1
      %p106 = por %p104, %p105
      %p108 = scmp.ne.s32.totalorder %s93, %s107
      %p109 = scmp.eq.s32.totalorder %s20, 0
      %p110 = por %p108, %p109
      %s112 = sadd.s32 %s111, 1
      %p115 = scmp.eq.s32.totalorder %s14, 1
      %p116 = scmp.ne.s32.totalorder %s111, %s113
      %p117 = scmp.eq.s32.totalorder %s14, 0
      %p118 = por %p116, %p117
      %p119 = scmp.ne.s32.totalorder %s111, %s113
      %p120 = scmp.eq.s32.totalorder %s19, 1
      %p121 = por %p119, %p120
      %p122 = scmp.ne.s32.totalorder %s113, %s114
      %p123 = scmp.eq.s32.totalorder %s19, 0
      %p124 = por %p122, %p123
      %p125 = scmp.ne.s32.totalorder %s113, %s114
      %p126 = scmp.eq.s32.totalorder %s20, 1
      %p127 = por %p125, %p126
      %p129 = scmp.ne.s32.totalorder %s114, %s128
      %p130 = scmp.eq.s32.totalorder %s20, 0
      %p131 = por %p129, %p130
      %s132 = ssub.s32 %s14, %s21
      %p133 = scmp.eq.s32.totalorder %s132, 0
      %s135 = sadd.s32 %s134, 1
      %s136 = scalar_select %p133, %s134, %s135
      %p139 = pneg %p133
      %p140 = scmp.eq.s32.totalorder %s14, 1
      %p141 = por %p139, %p140
      %p142 = scmp.ne.s32.totalorder %s134, %s137
      %p143 = scmp.eq.s32.totalorder %s14, 0
      %p144 = por %p142, %p143
      %p145 = scmp.ne.s32.totalorder %s134, %s137
      %p146 = scmp.eq.s32.totalorder %s19, 1
      %p147 = por %p145, %p146
      %p148 = scmp.ne.s32.totalorder %s137, %s138
      %p149 = scmp.eq.s32.totalorder %s19, 0
      %p150 = por %p148, %p149
      %p151 = scmp.ne.s32.totalorder %s137, %s138
      %p152 = scmp.eq.s32.totalorder %s20, 1
      %p153 = por %p151, %p152
      %p155 = scmp.ne.s32.totalorder %s138, %s154
      %p156 = scmp.eq.s32.totalorder %s20, 0
      %p157 = por %p155, %p156
      %p158 = scmp.le.s32.totalorder 1, %s14
      %p159 = scmp.lt.s32.totalorder %s14, 3
      %p160 = pnand %p158, %p159
      %p161 = pneg %p160
      // Predicated region
      $region9: #{tpu_custom_call.1} parent=5 // pred_check
        _
      $region10: #{tpu_custom_call.1} parent=5 // pred_check_branch
        %163 = sbr.rel (%p160) target = $region12
      $region11: #{tpu_custom_call.1} parent=5 // pred_region
        %s164 = ssub.s32 %s14, 1
        // Predicated region
        $region13: #{tpu_custom_call.1} parent=11 // pred_check
          %p165 = pneg %p61
        $region14: #{tpu_custom_call.1} parent=11 // pred_check_branch
          %167 = sbr.rel (%p165) target = $region16
        $region15: #{tpu_custom_call.1} parent=11 // pred_region
          _
        $region16: #{tpu_custom_call.1} parent=11 // pred_fallthru
          _
        // Predicated region
        $region17: #{tpu_custom_call.1} parent=11 // pred_check
          %p168 = pneg %p82
        $region18: #{tpu_custom_call.1} parent=11 // pred_check_branch
          %170 = sbr.rel (%p168) target = $region20
        $region19: #{tpu_custom_call.1} parent=11 // pred_region
          _
        $region20: #{tpu_custom_call.1} parent=11 // pred_fallthru
          _
        // Predicated region
        $region21: #{tpu_custom_call.1} parent=11 // pred_check
          %p171 = pneg %p103
        $region22: #{tpu_custom_call.1} parent=11 // pred_check_branch
          %173 = sbr.rel (%p171) target = $region24
        $region23: #{tpu_custom_call.1} parent=11 // pred_region
          _
        $region24: #{tpu_custom_call.1} parent=11 // pred_fallthru
          _
        // Predicated region
        $region25: #{tpu_custom_call.1} parent=11 // pred_check
          %p174 = pneg %p124
        $region26: #{tpu_custom_call.1} parent=11 // pred_check_branch
          %176 = sbr.rel (%p174) target = $region28
        $region27: #{tpu_custom_call.1} parent=11 // pred_region
          _
        $region28: #{tpu_custom_call.1} parent=11 // pred_fallthru
          _
      $region12: #{tpu_custom_call.1} parent=5 // pred_fallthru
        _
      %p177 = scmp.lt.s32.totalorder %s14, 2
      // Predicated region
      $region29: #{tpu_custom_call.1} parent=5 // pred_check
        %p178 = pneg %p177
      $region30: #{tpu_custom_call.1} parent=5 // pred_check_branch
        %180 = sbr.rel (%p178) target = $region32
      $region31: #{tpu_custom_call.1} parent=5 // pred_region
        // Predicated region
        $region33: #{tpu_custom_call.1} parent=31 // pred_check
          %p181 = pneg %p34
        $region34: #{tpu_custom_call.1} parent=31 // pred_check_branch
          %183 = sbr.rel (%p181) target = $region36
        $region35: #{tpu_custom_call.1} parent=31 // pred_region
          %p184 = scmp.lt.s32.totalorder %s14, 1
          %s185 = scalar_select %p184, %s14, 1
          %s186 = smul.addr %s185, 8
          %s187 = scalar_lea.vmem %s0, %s186
        $region36: #{tpu_custom_call.1} parent=31 // pred_fallthru
          _
      $region32: #{tpu_custom_call.1} parent=5 // pred_fallthru
        _
      %p188 = scmp.le.s32.totalorder 1, %s14
      %p189 = scmp.lt.s32.totalorder %s14, 3
      %p190 = pnand %p188, %p189
      %p191 = pneg %p190
      // Predicated region
      $region37: #{tpu_custom_call.1} parent=5 // pred_check
        _
      $region38: #{tpu_custom_call.1} parent=5 // pred_check_branch
        %193 = sbr.rel (%p190) target = $region40
      $region39: #{tpu_custom_call.1} parent=5 // pred_region
        %s194 = ssub.s32 %s14, 1
        %p195 = scmp.lt.s32.totalorder %s19, 1
        %s196 = scalar_select %p195, %s19, 1
        %s197 = smul.addr %s196, 8
        %s198 = scalar_lea.vmem %s0, %s197
        %p199 = pneg %p40
        %p200 = pneg %p37
        %p201 = pneg %p61
        %p202 = pneg %p58
        %p203 = pneg %p82
        %p204 = pneg %p79
        %p205 = pneg %p103
        %p206 = pneg %p100
        %p207 = pneg %p124
        %p208 = pneg %p121
        %p209 = pneg %p150
        %p210 = pneg %p147
        %s211 = sand.u32 %s137, 1
        %s212 = scalar_lea.sflag [#allocation3], %s211
        %s213 = sand.u32 %s137, 1
        %s214 = smul.addr %s213, 8
        %s215 = scalar_lea.vmem [#allocation2], %s214
        %p216 = scmp.lt.s32.totalorder %s19, 1
        %s217 = scalar_select %p216, %s19, 1
        %s218 = smul.addr %s217, 8
        %s219 = scalar_lea.vmem %s0, %s218
        %v220 = vld [vmem:[%s219] sm:$0xff]
        %v221 = vld [vmem:[%s1] sm:$0xff]
        %v222 = vld [vmem:[%s1 + $0x8] sm:$0xff]
        %v223 = vld [vmem:[%s1 + $0x10] sm:$0xff]
        %v224 = vld [vmem:[%s1 + $0x18] sm:$0xff]
        %v225 = vld [vmem:[%s2] sm:$0x1]
        %v227 = vlaneseq
        %v228 = vshrl.u32 %v227, 7
        %v229 = vsub.s32 0, %v228
        %v230 = vrot.slane %v225, %v229
        %vm232 = vcmask 261120
        %v234 = vsel %vm232, %v220, 0
        %236 = vmatprep.subr.mxu0 0.0
        %237 = vmatpush1.msra.mxu0 0.0
        %238 = vmatprep.subr.mxu0 0.0
        %239 = vmatpush1.msra.mxu0 0.0
        %240 = vmatprep.subr.mxu0 0.0
        %241 = vmatpush1.msra.mxu0 0.0
        %242 = vmatprep.subr.mxu0 0.0
        %243 = vmatpush1.msra.mxu0 0.0
        %244 = vmatprep.subr.mxu0 0.0
        %245 = vmatpush1.msra.mxu0 0.0
        %246 = vmatprep.subr.mxu0 0.0
        %247 = vmatpush1.msra.mxu0 0.0
        %248 = vmatprep.subr.mxu0 0.0
        %249 = vmatpush1.msra.mxu0 0.0
        %250 = vmatprep.subr.mxu0 0.0
        %251 = vmatpush1.msra.mxu0 0.0
        %252 = vmatprep.subr.mxu0 0.0
        %253 = vmatpush1.msra.mxu0 0.0
        %254 = vmatprep.subr.mxu0 0.0
        %255 = vmatpush1.msra.mxu0 0.0
        %256 = vmatprep.subr.mxu0 0.0
        %257 = vmatpush1.msra.mxu0 0.0
        %258 = vmatprep.subr.mxu0 0.0
        %259 = vmatpush1.msra.mxu0 0.0
        %260 = vmatprep.subr.mxu0 0.0
        %261 = vmatpush1.msra.mxu0 %v224
        %262 = vmatprep.subr.mxu0 0.0
        %263 = vmatpush1.msra.mxu0 %v223
        %264 = vmatprep.subr.mxu0 0.0
        %265 = vmatpush1.msra.mxu0 %v222
        %266 = vmatprep.subr.mxu0 0.0
        %267 = vmatpush1.msra.mxu0 %v221
        %268 = vmatprep.subr.mxu0 0.0
        %269 = vmatpush2.msra.mxu0 0.0
        %270 = vmatprep.subr.mxu0 0.0
        %271 = vmatpush2.msra.mxu0 0.0
        %272 = vmatprep.subr.mxu0 0.0
        %273 = vmatpush2.msra.mxu0 0.0
        %274 = vmatprep.subr.mxu0 0.0
        %275 = vmatpush2.msra.mxu0 0.0
        %276 = vmatprep.subr.mxu0 0.0
        %277 = vmatpush2.msra.mxu0 0.0
        %278 = vmatprep.subr.mxu0 0.0
        %279 = vmatpush2.msra.mxu0 0.0
        %280 = vmatprep.subr.mxu0 0.0
        %281 = vmatpush2.msra.mxu0 0.0
        %282 = vmatprep.subr.mxu0 0.0
        %283 = vmatpush2.msra.mxu0 0.0
        %284 = vmatprep.subr.mxu0 0.0
        %285 = vmatpush2.msra.mxu0 0.0
        %286 = vmatprep.subr.mxu0 0.0
        %287 = vmatpush2.msra.mxu0 0.0
        %288 = vmatprep.subr.mxu0 0.0
        %289 = vmatpush2.msra.mxu0 0.0
        %290 = vmatprep.subr.mxu0 0.0
        %291 = vmatpush2.msra.mxu0 0.0
        %292 = vmatprep.subr.mxu0 0.0
        %293 = vmatpush2.msra.mxu0 0.0
        %294 = vmatprep.subr.mxu0 0.0
        %295 = vmatpush2.msra.mxu0 0.0
        %296 = vmatprep.subr.mxu0 0.0
        %297 = vmatpush2.msra.mxu0 0.0
        %298 = vmatprep.subr.mxu0 0.0
        %299 = vmatpush2.msra.mxu0 0.0
        %300 = vmatprep.mubr.f32.mxu0 0.0
        %301 = vmatmul.mubr.f32.gmra.mxu0 %v234
        %v302 = vpop.f32.mrf.mxu0
        %v303 = vadd.f32 %v230, %v302
        %v304 = vpop.f32.mrf.mxu0
        %305 = vdwg.mxu0
        %v306 = vmax.f32 %v303, 0.0
        %v307 = vld [vmem:[%s3] sm:$0xff]
        %v308 = vld [vmem:[%s3 + $0x8] sm:$0xff]
        %v309 = vld [vmem:[%s3 + $0x10] sm:$0xff]
        %v310 = vld [vmem:[%s3 + $0x18] sm:$0xff]
        %v311 = vld [vmem:[%s3 + $0x20] sm:$0xff]
        %v312 = vld [vmem:[%s3 + $0x28] sm:$0xff]
        %v313 = vld [vmem:[%s3 + $0x30] sm:$0xff]
        %v314 = vld [vmem:[%s3 + $0x38] sm:$0xff]
        %v315 = vld [vmem:[%s3 + $0x40] sm:$0xff]
        %v316 = vld [vmem:[%s3 + $0x48] sm:$0xff]
        %v317 = vld [vmem:[%s3 + $0x50] sm:$0xff]
        %v318 = vld [vmem:[%s3 + $0x58] sm:$0xff]
        %v319 = vld [vmem:[%s3 + $0x60] sm:$0xff]
        %v320 = vld [vmem:[%s3 + $0x68] sm:$0xff]
        %v321 = vld [vmem:[%s3 + $0x70] sm:$0xff]
        %v322 = vld [vmem:[%s3 + $0x78] sm:$0xff]
        %v323 = vld [vmem:[%s4] sm:$0x1]
        %v325 = vlaneseq
        %v326 = vshrl.u32 %v325, 7
        %v327 = vsub.s32 0, %v326
        %v328 = vrot.slane %v323, %v327
        %330 = vmatprep.subr.mxu0 0.0
        %331 = vmatpush1.msra.mxu0 %v322
        %332 = vmatprep.subr.mxu0 0.0
        %333 = vmatpush1.msra.mxu0 %v321
        %334 = vmatprep.subr.mxu0 0.0
        %335 = vmatpush1.msra.mxu0 %v320
        %336 = vmatprep.subr.mxu0 0.0
        %337 = vmatpush1.msra.mxu0 %v319
        %338 = vmatprep.subr.mxu0 0.0
        %339 = vmatpush1.msra.mxu0 %v318
        %340 = vmatprep.subr.mxu0 0.0
        %341 = vmatpush1.msra.mxu0 %v317
        %342 = vmatprep.subr.mxu0 0.0
        %343 = vmatpush1.msra.mxu0 %v316
        %344 = vmatprep.subr.mxu0 0.0
        %345 = vmatpush1.msra.mxu0 %v315
        %346 = vmatprep.subr.mxu0 0.0
        %347 = vmatpush1.msra.mxu0 %v314
        %348 = vmatprep.subr.mxu0 0.0
        %349 = vmatpush1.msra.mxu0 %v313
        %350 = vmatprep.subr.mxu0 0.0
        %351 = vmatpush1.msra.mxu0 %v312
        %352 = vmatprep.subr.mxu0 0.0
        %353 = vmatpush1.msra.mxu0 %v311
        %354 = vmatprep.subr.mxu0 0.0
        %355 = vmatpush1.msra.mxu0 %v310
        %356 = vmatprep.subr.mxu0 0.0
        %357 = vmatpush1.msra.mxu0 %v309
        %358 = vmatprep.subr.mxu0 0.0
        %359 = vmatpush1.msra.mxu0 %v308
        %360 = vmatprep.subr.mxu0 0.0
        %361 = vmatpush1.msra.mxu0 %v307
        %362 = vmatprep.subr.mxu0 0.0
        %363 = vmatpush2.msra.mxu0 0.0
        %364 = vmatprep.subr.mxu0 0.0
        %365 = vmatpush2.msra.mxu0 0.0
        %366 = vmatprep.subr.mxu0 0.0
        %367 = vmatpush2.msra.mxu0 0.0
        %368 = vmatprep.subr.mxu0 0.0
        %369 = vmatpush2.msra.mxu0 0.0
        %370 = vmatprep.subr.mxu0 0.0
        %371 = vmatpush2.msra.mxu0 0.0
        %372 = vmatprep.subr.mxu0 0.0
        %373 = vmatpush2.msra.mxu0 0.0
        %374 = vmatprep.subr.mxu0 0.0
        %375 = vmatpush2.msra.mxu0 0.0
        %376 = vmatprep.subr.mxu0 0.0
        %377 = vmatpush2.msra.mxu0 0.0
        %378 = vmatprep.subr.mxu0 0.0
        %379 = vmatpush2.msra.mxu0 0.0
        %380 = vmatprep.subr.mxu0 0.0
        %381 = vmatpush2.msra.mxu0 0.0
        %382 = vmatprep.subr.mxu0 0.0
        %383 = vmatpush2.msra.mxu0 0.0
        %384 = vmatprep.subr.mxu0 0.0
        %385 = vmatpush2.msra.mxu0 0.0
        %386 = vmatprep.subr.mxu0 0.0
        %387 = vmatpush2.msra.mxu0 0.0
        %388 = vmatprep.subr.mxu0 0.0
        %389 = vmatpush2.msra.mxu0 0.0
        %390 = vmatprep.subr.mxu0 0.0
        %391 = vmatpush2.msra.mxu0 0.0
        %392 = vmatprep.subr.mxu0 0.0
        %393 = vmatpush2.msra.mxu0 0.0
        %394 = vmatprep.mubr.f32.mxu0 0.0
        %395 = vmatmul.mubr.f32.gmra.mxu0 %v306
        %v396 = vpop.f32.mrf.mxu0
        %v397 = vadd.f32 %v328, %v396
        %v398 = vpop.f32.mrf.mxu0
        %399 = vdwg.mxu0
        %v400 = vtanh.pop %v397
        %401 = vst.msk [vmem:[%s215] sm:$0xff] %vm232, %v400
        %s402 = sand.u32 %s137, 1
        %s403 = scalar_lea.sflag [#allocation3], %s402
        %s404 = sand.u32 %s137, 1
        %s405 = smul.addr %s404, 8
        %s406 = scalar_lea.vmem [#allocation2], %s405
        // Predicated region
        $region41: #{tpu_custom_call.1} parent=39 // pred_check
          %p407 = pneg %p147
        $region42: #{tpu_custom_call.1} parent=39 // pred_check_branch
          %409 = sbr.rel (%p407) target = $region44
        $region43: #{tpu_custom_call.1} parent=39 // pred_region
          %s411 = ssub.s32 128, 128
          %412 = vsyncadd %s403, %s411
          %s413 = smul.addr %s19, 128
          %s414 = scalar_lea.hbm %s5, %s413
          %s416 = sshll.u32 %s406, 4
          %s417 = int_to_ptr.vmem [resolvable:$true] %s416
          %419 = dma.vmem_to_hbm [thread:$0]  %s417, 128, %s414, %s403
        $region44: #{tpu_custom_call.1} parent=39 // pred_fallthru
          _
      $region40: #{tpu_custom_call.1} parent=5 // pred_fallthru
        _
      %p420 = scmp.le.s32.totalorder 2, %s14
      // Predicated region
      $region45: #{tpu_custom_call.1} parent=5 // pred_check
        %p421 = pneg %p420
      $region46: #{tpu_custom_call.1} parent=5 // pred_check_branch
        %423 = sbr.rel (%p421) target = $region48
      $region47: #{tpu_custom_call.1} parent=5 // pred_region
        %s424 = ssub.s32 %s14, 2
        // Predicated region
        $region49: #{tpu_custom_call.1} parent=47 // pred_check
          %p425 = pneg %p153
        $region50: #{tpu_custom_call.1} parent=47 // pred_check_branch
          %427 = sbr.rel (%p425) target = $region52
        $region51: #{tpu_custom_call.1} parent=47 // pred_region
          %s428 = sand.u32 %s138, 1
          %s429 = scalar_lea.sflag [#allocation3], %s428
          %s430 = sand.u32 %s138, 1
          %s431 = smul.addr %s430, 8
          %s432 = scalar_lea.vmem [#allocation2], %s431
          %433 = dma.done %s429, 128
        $region52: #{tpu_custom_call.1} parent=47 // pred_fallthru
          _
      $region48: #{tpu_custom_call.1} parent=5 // pred_fallthru
        _
    $region6: #{tpu_custom_call.1} parent=1 // loop_footer
      %s18 = sadd.s32 1, %s14
    $region7: #{tpu_custom_call.1} parent=1 // loop_footer_branch
      %13 = sbr.rel target = $region3
    $region8: #{tpu_custom_call.1} parent=1 // loop_exit
      _
    %434 = vsyncpa [#allocation3], 1
    %s435 = scalar_lea.sflag [#allocation3], 1
    %436 = vsyncpa %s435, 1

</llo_original>
